<compile_context>
chip_gen: v7x
topology: tpu7x:2x2x1
jax: 0.10.0
libtpu: 0.0.40
codegen_flags: <defaults>
</compile_context>

<pallas_src>
import functools

import jax
import jax.numpy as jnp
from jax.experimental import pallas as pl
from jax.experimental.pallas import tpu as pltpu


VMEM_LIMIT = 64 * 1024 * 1024  # explicit scoped-VMEM cap (v5e default is 16 MiB)


# ----------------------------------------------------------------------------
# tiling helper
# ----------------------------------------------------------------------------
def _tile(dim, target, align):
    """Largest tile <= target that divides dim and is a multiple of `align`;
    falls back to the full dim (always legal) when no such tile exists."""
    if dim <= target:
        return dim
    t = (target // align) * align
    while t >= align:
        if dim % t == 0:
            return t
        t -= align
    return dim


# ----------------------------------------------------------------------------
# dense: y = act(x @ w + b), tiled 3-D grid with f32 accumulator
# ----------------------------------------------------------------------------
def _dense_kernel(x_ref, w_ref, b_ref, o_ref, acc_ref, *, act):
    @pl.when(pl.program_id(2) == 0)
    def _():
        acc_ref[...] = jnp.zeros_like(acc_ref)

    acc_ref[...] += jnp.dot(x_ref[...], w_ref[...],
                            preferred_element_type=jnp.float32)

    @pl.when(pl.program_id(2) == pl.num_programs(2) - 1)
    def _():
        y = acc_ref[...] + b_ref[...]            # bias in f32
        if act == "gelu":
            y = jax.nn.gelu(y, approximate=False)   # BERT: exact (erf) GELU
        elif act == "tanh":
            y = jnp.tanh(y)
        o_ref[...] = y.astype(o_ref.dtype)


def dense(x, w, b, act="none", out_dtype=jnp.bfloat16, tm=512, tn=512, tk=768):
    """act(x @ w + b).  x:[M,K] bf16, w:[K,N] bf16, b:[N] f32 -> [M,N]."""
    M, K = x.shape
    N = w.shape[1]
    tm = _tile(M, tm, 8)
    tn = _tile(N, tn, 128)
    tk = _tile(K, tk, 256)       # 256-aligned contraction tiles (v6e/v7x MXU)
    grid = (M // tm, N // tn, K // tk)
    return pl.pallas_call(
        functools.partial(_dense_kernel, act=act),
        out_shape=jax.ShapeDtypeStruct((M, N), out_dtype),
        grid_spec=pltpu.PrefetchScalarGridSpec(
            num_scalar_prefetch=0,
            grid=grid,
            in_specs=[
                pl.BlockSpec((tm, tk), lambda i, j, k: (i, k)),
                pl.BlockSpec((tk, tn), lambda i, j, k: (k, j)),
                pl.BlockSpec((1, tn), lambda i, j, k: (0, j)),
            ],
            out_specs=pl.BlockSpec((tm, tn), lambda i, j, k: (i, j)),
            scratch_shapes=[pltpu.VMEM((tm, tn), jnp.float32)],
        ),
        compiler_params=pltpu.CompilerParams(
            dimension_semantics=("parallel", "parallel", "arbitrary"),
            vmem_limit_bytes=VMEM_LIMIT),
    )(x, w, b.reshape(1, N).astype(jnp.float32))


# ----------------------------------------------------------------------------
# dense + residual-add + LayerNorm fused epilogue (for N == hidden projections)
# ----------------------------------------------------------------------------
def _dense_res_ln_kernel(x_ref, w_ref, b_ref, r_ref, g_ref, be_ref,
                         o_ref, acc_ref, *, eps):
    @pl.when(pl.program_id(1) == 0)
    def _():
        acc_ref[...] = jnp.zeros_like(acc_ref)

    acc_ref[...] += jnp.dot(x_ref[...], w_ref[...],
                            preferred_element_type=jnp.float32)

    @pl.when(pl.program_id(1) == pl.num_programs(1) - 1)
    def _():
        y = acc_ref[...] + b_ref[...] + r_ref[...].astype(jnp.float32)
        mu = jnp.mean(y, axis=-1, keepdims=True)
        var = jnp.mean(jnp.square(y - mu), axis=-1, keepdims=True)
        inv = jax.lax.rsqrt(var + eps)
        o_ref[...] = ((y - mu) * inv * g_ref[...] + be_ref[...]).astype(o_ref.dtype)


def dense_res_ln(x, w, b, residual, gamma, beta, eps=1e-12,
                 out_dtype=jnp.bfloat16, tm=512, tk=768):
    """LayerNorm(x @ w + b + residual).  Full N kept in one tile."""
    M, K = x.shape
    N = w.shape[1]
    tm = _tile(M, tm, 8)
    tk = _tile(K, tk, 256)
    grid = (M // tm, K // tk)
    vec = pl.BlockSpec((1, N), lambda i, k: (0, 0))
    return pl.pallas_call(
        functools.partial(_dense_res_ln_kernel, eps=eps),
        out_shape=jax.ShapeDtypeStruct((M, N), out_dtype),
        grid_spec=pltpu.PrefetchScalarGridSpec(
            num_scalar_prefetch=0,
            grid=grid,
            in_specs=[
                pl.BlockSpec((tm, tk), lambda i, k: (i, k)),
                pl.BlockSpec((tk, N), lambda i, k: (k, 0)),
                vec,
                pl.BlockSpec((tm, N), lambda i, k: (i, 0)),
                vec,
                vec,
            ],
            out_specs=pl.BlockSpec((tm, N), lambda i, k: (i, 0)),
            scratch_shapes=[pltpu.VMEM((tm, N), jnp.float32)],
        ),
        compiler_params=pltpu.CompilerParams(
            dimension_semantics=("parallel", "arbitrary"),
            vmem_limit_bytes=VMEM_LIMIT),
    )(x, w, b.reshape(1, N).astype(jnp.float32), residual,
      gamma.reshape(1, N).astype(jnp.float32),
      beta.reshape(1, N).astype(jnp.float32))


# ----------------------------------------------------------------------------
# standalone LayerNorm (only used for the embedding LN), row-tiled
# ----------------------------------------------------------------------------
def _ln_kernel(x_ref, g_ref, b_ref, o_ref, *, eps):
    x = x_ref[...].astype(jnp.float32)
    mu = jnp.mean(x, axis=-1, keepdims=True)
    var = jnp.mean(jnp.square(x - mu), axis=-1, keepdims=True)
    inv = jax.lax.rsqrt(var + eps)
    o_ref[...] = ((x - mu) * inv * g_ref[...] + b_ref[...]).astype(o_ref.dtype)


def layernorm(x, gamma, beta, eps=1e-12, tm=1024):
    """LayerNorm(x) over last dim.  x:[M,H] -> bf16 [M,H]."""
    M, H = x.shape
    tm = _tile(M, tm, 8)
    row_spec = pl.BlockSpec((tm, H), lambda i: (i, 0))
    vec_spec = pl.BlockSpec((1, H), lambda i: (0, 0))
    return pl.pallas_call(
        functools.partial(_ln_kernel, eps=eps),
        out_shape=jax.ShapeDtypeStruct((M, H), jnp.bfloat16),
        grid_spec=pltpu.PrefetchScalarGridSpec(
            num_scalar_prefetch=0, grid=(M // tm,),
            in_specs=[row_spec, vec_spec, vec_spec], out_specs=row_spec),
        compiler_params=pltpu.CompilerParams(
            dimension_semantics=("parallel",),
            vmem_limit_bytes=VMEM_LIMIT),
    )(x, gamma.reshape(1, H).astype(jnp.float32),
      beta.reshape(1, H).astype(jnp.float32))


# ----------------------------------------------------------------------------
# Attention core: consumes fused QKV [B,T,3H], query-tiled, writes [B,T,H]
# (head split done in VMEM inside the kernel; no XLA transposes)
# ----------------------------------------------------------------------------
def _attention_kernel(q_ref, k_ref, v_ref, bias_ref, o_ref, *, nH, scale):
    H = q_ref.shape[2]
    dh = H // nH
    bias = bias_ref[0]                                     # [1, T] f32
    for h in range(nH):                                    # static unroll
        sl = slice(h * dh, (h + 1) * dh)
        q_h = q_ref[0, :, sl]                              # [tq, dh] bf16
        k_h = k_ref[0, :, sl]                              # [T,  dh] bf16
        v_h = v_ref[0, :, sl]                              # [T,  dh] bf16
        s = jax.lax.dot_general(                           # q @ k^T
            q_h, k_h,
            dimension_numbers=(((1,), (1,)), ((), ())),
            preferred_element_type=jnp.float32)            # [tq, T] f32
        s = s * scale + bias
        s = s - jnp.max(s, axis=-1, keepdims=True)
        p = jnp.exp(s)
        p = p * pl.reciprocal(jnp.sum(p, axis=-1, keepdims=True), approx=True)
        ctx = jnp.dot(p.astype(v_h.dtype), v_h,
                      preferred_element_type=jnp.float32)  # [tq, dh]
        o_ref[0, :, sl] = ctx.astype(o_ref.dtype)


def attention_core(qkv, bias, nH, tq=256):
    """softmax(q k^T / sqrt(dh) + bias) v, per head.
    qkv:[B,T,3H] bf16 (columns [Wq|Wk|Wv]), bias:[B,1,T] f32 -> [B,T,H] bf16."""
    B, T, H3 = qkv.shape
    H = H3 // 3
    dh = H // nH
    tq = _tile(T, tq, 8)
    q_spec = pl.BlockSpec((1, tq, H), lambda b, qi: (b, qi, 0))
    k_spec = pl.BlockSpec((1, T, H), lambda b, qi: (b, 0, 1))
    v_spec = pl.BlockSpec((1, T, H), lambda b, qi: (b, 0, 2))
    bias_spec = pl.BlockSpec((1, 1, T), lambda b, qi: (b, 0, 0))
    out_spec = pl.BlockSpec((1, tq, H), lambda b, qi: (b, qi, 0))
    return pl.pallas_call(
        functools.partial(_attention_kernel, nH=nH, scale=1.0 / float(dh) ** 0.5),
        out_shape=jax.ShapeDtypeStruct((B, T, H), jnp.bfloat16),
        grid_spec=pltpu.PrefetchScalarGridSpec(
            num_scalar_prefetch=0, grid=(B, T // tq),
            in_specs=[q_spec, k_spec, v_spec, bias_spec],
            out_specs=out_spec),
        compiler_params=pltpu.CompilerParams(
            dimension_semantics=("parallel", "parallel"),
            vmem_limit_bytes=VMEM_LIMIT),
    )(qkv, qkv, qkv, bias)


# ----------------------------------------------------------------------------
# ASCC neighbor weighting, row-tiled (bf16 multiplies, f32 accumulation)
# ----------------------------------------------------------------------------
def _ascc_weight_kernel(e_ref, m_ref, w_ref, o_ref):
    m = m_ref[...].astype(jnp.float32)            # [tm, N]
    w = w_ref[...].astype(jnp.float32)
    wa = m * w + (1.0 - m) * (-999.0)             # mask*w + (~mask)*-999
    wa = wa - jnp.max(wa, axis=-1, keepdims=True)
    p = jnp.exp(wa)
    p = p * pl.reciprocal(jnp.sum(p, axis=-1, keepdims=True), approx=True)
    coef = (p * m).astype(e_ref.dtype)[..., None]  # [tm, N, 1] bf16
    e = e_ref[...]                                 # [tm, N, H] bf16 (no upcast)
    o_ref[...] = jnp.sum(e * coef, axis=1,
                         dtype=jnp.float32).astype(o_ref.dtype)


def ascc_weighted_embed(nbr_embed, mask, w, tm=256):
    """embed_adv = sum_N(nbr_embed * softmax(masked w) * mask).
    nbr_embed:[M,N,H] bf16, mask,w:[M,N] -> bf16 [M,H] (lane-dense H output)."""
    M, N, H = nbr_embed.shape
    tm = _tile(M, tm, 8)
    return pl.pallas_call(
        _ascc_weight_kernel,
        out_shape=jax.ShapeDtypeStruct((M, H), jnp.bfloat16),
        grid_spec=pltpu.PrefetchScalarGridSpec(
            num_scalar_prefetch=0, grid=(M // tm,),
            in_specs=[pl.BlockSpec((tm, N, H), lambda i: (i, 0, 0)),
                      pl.BlockSpec((tm, N), lambda i: (i, 0)),
                      pl.BlockSpec((tm, N), lambda i: (i, 0))],
            out_specs=pl.BlockSpec((tm, H), lambda i: (i, 0))),
        compiler_params=pltpu.CompilerParams(
            dimension_semantics=("parallel",),
            vmem_limit_bytes=VMEM_LIMIT),
    )(nbr_embed, mask, w)


# ----------------------------------------------------------------------------
# BERT-style encoder built from the kernels above (glue in plain JAX)
# ----------------------------------------------------------------------------
def bert_forward(params, cfg, attention_mask, token_type_ids, inputs_embeds):
    B, T = attention_mask.shape
    H, nH = cfg["hidden"], cfg["heads"]

    pos = params["pos_emb"][:T][None, :, :]
    typ = jnp.take(params["type_emb"], token_type_ids, axis=0)
    hidden = (inputs_embeds + pos + typ).astype(jnp.bfloat16)            # [B,T,H]
    hidden = layernorm(hidden.reshape(B * T, H),
                       params["emb_ln_g"], params["emb_ln_b"])           # [B*T,H]

    # additive attention bias, kept as [B, 1, T] (never duplicated per head)
    bias = ((1.0 - attention_mask.astype(jnp.float32)) * (-1e9))[:, None, :]

    for lp in params["layers"]:
        x2 = hidden                                                      # [B*T,H]
        # fused QKV projection; columns laid out as [Wq | Wk | Wv]
        qkv = dense(x2, lp["qkv_w"], lp["qkv_b"])                        # [B*T,3H]
        qkv = qkv.reshape(B, T, 3 * H)                                   # free reshape

        # attention consumes QKV directly, writes lane-dense [B,T,H]
        ctx = attention_core(qkv, bias, nH).reshape(B * T, H)

        # attention output projection + residual + LayerNorm (fused epilogue)
        hidden2 = dense_res_ln(ctx, lp["ao_w"], lp["ao_b"], x2,
                               lp["attn_ln_g"], lp["attn_ln_b"])

        # FFN
        inter = dense(hidden2, lp["i_w"], lp["i_b"], act="gelu")
        hidden = dense_res_ln(inter, lp["o_w"], lp["o_b"], hidden2,
                              lp["out_ln_g"], lp["out_ln_b"])

    # pooler: tanh(W . h[:,0] + b)
    cls_tok = hidden.reshape(B, T, H)[:, 0, :]
    pooled = dense(cls_tok, params["pool_w"], params["pool_b"], act="tanh")
    return pooled                                                        # [B,H]


def ascc_forward(params, cfg, input_ids, attention_mask, token_type_ids, w_init):
    B, T = input_ids.shape
    H, N, C = cfg["hidden"], cfg["max_nbr_num"], cfg["num_labels"]

    # clean inputs_embeds (equivalent to BERT's internal word-embedding lookup)
    clean_embeds = jnp.take(params["word_emb"], input_ids, axis=0)       # [B,T,H]

    # adversarial (convex-hull) embedding
    nbr_ids = jnp.take(params["nbrs"], input_ids, axis=0)                # [B,T,N]
    weighting_mask = (nbr_ids != 0).astype(jnp.float32)                  # [B,T,N]
    # TODO(synk): fuse this gather into the ASCC kernel (word_emb in HBM via
    # memory_space=pl.ANY + scalar-prefetched nbr_ids + manual DMA) to avoid
    # materializing the [B,T,N,H] tensor in HBM at production sizes.
    nbr_embed = jnp.take(params["word_emb"], nbr_ids, axis=0)            # [B,T,N,H]

    # TODO(synk): inner Adam loop refining `w` (num_steps > 0) needs autograd
    # through BERT; exact for num_steps == 0 (w = Kaiming-normal init).
    embed_adv = ascc_weighted_embed(
        nbr_embed.reshape(B * T, N, H),
        weighting_mask.reshape(B * T, N),
        w_init.reshape(B * T, N),
    ).reshape(B, T, H)

    # run clean + adversarial as ONE batched BERT pass (weights streamed once)
    both_embeds = jnp.concatenate(
        [clean_embeds.astype(jnp.bfloat16), embed_adv.astype(jnp.bfloat16)], axis=0)
    am2 = jnp.concatenate([attention_mask, attention_mask], axis=0)
    tt2 = jnp.concatenate([token_type_ids, token_type_ids], axis=0)

    pooled = bert_forward(params, cfg, am2, tt2, both_embeds)            # [2B,H]

    # dropout -> identity (eval). Classifier padded to a lane-dense 128-wide
    # matmul; true logits sliced out afterwards (XLA slice, tiny).
    Cp = 128
    cls_w_p = jnp.pad(params["cls_w"], ((0, 0), (0, Cp - C)))
    cls_b_p = jnp.pad(params["cls_b"], (0, Cp - C))
    logits = dense(pooled, cls_w_p, cls_b_p, out_dtype=jnp.float32)[:, :C]
    return logits[:B], logits[B:]


# ----------------------------------------------------------------------------
# Deterministic parameter construction (bf16 weights, f32 biases / LN params)
# ----------------------------------------------------------------------------
def init_params(key, cfg):
    H, I, L = cfg["hidden"], cfg["intermediate"], cfg["layers"]
    V, P, Tv, C, N = (cfg["vocab"], cfg["max_pos"], cfg["type_vocab"],
                      cfg["num_labels"], cfg["max_nbr_num"])
    ks = iter(jax.random.split(key, 128))

    def nrm(shape, s=0.02, dtype=jnp.bfloat16):
        return (jax.random.normal(next(ks), shape, jnp.float32) * s).astype(dtype)

    params = {
        "word_emb": nrm((V, H)),
        "pos_emb": nrm((P, H)),
        "type_emb": nrm((Tv, H)),
        "emb_ln_g": jnp.ones((H,), jnp.float32),
        "emb_ln_b": jnp.zeros((H,), jnp.float32),
        "pool_w": nrm((H, H)),
        "pool_b": jnp.zeros((H,), jnp.float32),
        "cls_w": nrm((H, C)),
        "cls_b": jnp.zeros((C,), jnp.float32),
        "layers": [],
    }
    for _ in range(L):
        params["layers"].append({
            # qkv_w columns must be [Wq | Wk | Wv], each internally [nH, dh]
            # (matches the in-kernel head split of attention_core).
            "qkv_w": nrm((H, 3 * H)), "qkv_b": jnp.zeros((3 * H,), jnp.float32),
            "ao_w": nrm((H, H)), "ao_b": jnp.zeros((H,), jnp.float32),
            "attn_ln_g": jnp.ones((H,), jnp.float32),
            "attn_ln_b": jnp.zeros((H,), jnp.float32),
            "i_w": nrm((H, I)), "i_b": jnp.zeros((I,), jnp.float32),
            "o_w": nrm((I, H)), "o_b": jnp.zeros((H,), jnp.float32),
            "out_ln_g": jnp.ones((H,), jnp.float32),
            "out_ln_b": jnp.zeros((H,), jnp.float32),
        })

    # synthetic neighbor table: column 0 is the token itself, rest random (0 = pad)
    nbr_rest = jax.random.randint(next(ks), (V, N - 1), 0, V, jnp.int32)
    params["nbrs"] = jnp.concatenate(
        [jnp.arange(V, dtype=jnp.int32)[:, None], nbr_rest], axis=1)      # [V,N]
    return params


# ----------------------------------------------------------------------------
# Main
# ----------------------------------------------------------------------------
if __name__ == "__main__":
    # hidden=128 keeps the Q/K/V column blocks lane-aligned (multiples of 128)
    # even at this small test size; real BERT-base (H=768) is aligned as well.
    cfg = dict(vocab=100, hidden=128, intermediate=256, heads=2, layers=2,
               max_pos=64, type_vocab=2, num_labels=2, max_nbr_num=4)
    B, T = 2, 8

    key = jax.random.PRNGKey(0)
    k_params, k_ids, k_w = jax.random.split(key, 3)

    params = init_params(k_params, cfg)

    input_ids = jax.random.randint(k_ids, (B, T), 1, cfg["vocab"], jnp.int32)
    attention_mask = jnp.ones((B, T), jnp.int32)
    token_type_ids = jnp.zeros((B, T), jnp.int32)

    # kaiming_normal_ on w of shape [B, T, N, 1]: std = sqrt(2 / fan_in),
    # fan_in = T * N * 1 (PyTorch convention for a 4-D tensor)
    fan_in = T * cfg["max_nbr_num"]
    w_init = (jax.random.normal(k_w, (B, T, cfg["max_nbr_num"], 1), jnp.float32)
              * jnp.sqrt(2.0 / fan_in))

    clean_logits, adv_logits = ascc_forward(
        params, cfg, input_ids, attention_mask, token_type_ids, w_init)
    jax.block_until_ready((clean_logits, adv_logits))

    assert clean_logits.shape == (B, cfg["num_labels"])
    assert adv_logits.shape == (B, cfg["num_labels"])
    print("KERNEL_OK")
</pallas_src>

<mosaic_0001>
module attributes {stable_mosaic.version = 11 : i64} {
  func.func @_ascc_weight_kernel(%arg0: i32, %arg1: memref<16x4x128xbf16, #tpu.memory_space<vmem>>, %arg2: memref<16x4xf32, #tpu.memory_space<vmem>>, %arg3: memref<16x4xf32, #tpu.memory_space<vmem>>, %arg4: memref<16x128xbf16, #tpu.memory_space<vmem>>) attributes {dimension_semantics = [#tpu.dimension_semantics<parallel>], iteration_bounds = array<i64: 1>, scalar_prefetch = 0 : i64, scratch_operands = 0 : i64, tpu.core_type = #tpu.core_type<tc>, window_params = [{transform_indices = @transform_0, window_bounds = array<i64: 16, 4, 128>}, {transform_indices = @transform_1, window_bounds = array<i64: 16, 4>}, {transform_indices = @transform_2, window_bounds = array<i64: 16, 4>}, {transform_indices = @transform_3, window_bounds = array<i64: 16, 128>}]} {
    %c0 = arith.constant 0 : index
    %c0_0 = arith.constant 0 : index
    %0 = vector.load %arg2[%c0, %c0_0] : memref<16x4xf32, #tpu.memory_space<vmem>>, vector<16x4xf32>
    %c0_1 = arith.constant 0 : index
    %c0_2 = arith.constant 0 : index
    %1 = vector.load %arg3[%c0_1, %c0_2] : memref<16x4xf32, #tpu.memory_space<vmem>>, vector<16x4xf32>
    %2 = arith.mulf %0, %1 : vector<16x4xf32>
    %cst = arith.constant 1.000000e+00 : f32
    %3 = vector.broadcast %cst : f32 to vector<16x4xf32>
    %4 = arith.subf %3, %0 : vector<16x4xf32>
    %cst_3 = arith.constant -9.990000e+02 : f32
    %5 = vector.broadcast %cst_3 : f32 to vector<16x4xf32>
    %6 = arith.mulf %4, %5 : vector<16x4xf32>
    %7 = arith.addf %2, %6 : vector<16x4xf32>
    %cst_4 = arith.constant dense<0xFF800000> : vector<16xf32>
    %8 = vector.multi_reduction <maximumf>, %7, %cst_4 [1] : vector<16x4xf32> to vector<16xf32>
    %9 = vector.shape_cast %8 : vector<16xf32> to vector<16x1xf32>
    %10 = vector.broadcast %9 : vector<16x1xf32> to vector<16x4xf32>
    %11 = arith.subf %7, %10 : vector<16x4xf32>
    %12 = math.exp %11 : vector<16x4xf32>
    %cst_5 = arith.constant dense<0.000000e+00> : vector<16xf32>
    %13 = vector.multi_reduction <add>, %12, %cst_5 [1] : vector<16x4xf32> to vector<16xf32>
    %14 = vector.shape_cast %13 : vector<16xf32> to vector<16x1xf32>
    %15 = tpu.reciprocal %14 {approx = true} : vector<16x1xf32> -> vector<16x1xf32>
    %16 = vector.broadcast %15 : vector<16x1xf32> to vector<16x4xf32>
    %17 = arith.mulf %12, %16 : vector<16x4xf32>
    %18 = arith.mulf %17, %0 : vector<16x4xf32>
    %19 = arith.truncf %18 : vector<16x4xf32> to vector<16x4xbf16>
    %20 = vector.shape_cast %19 : vector<16x4xbf16> to vector<16x4x1xbf16>
    %c0_6 = arith.constant 0 : index
    %c0_7 = arith.constant 0 : index
    %c0_8 = arith.constant 0 : index
    %21 = vector.load %arg1[%c0_6, %c0_7, %c0_8] : memref<16x4x128xbf16, #tpu.memory_space<vmem>>, vector<16x4x128xbf16>
    %22 = vector.broadcast %20 : vector<16x4x1xbf16> to vector<16x4x128xbf16>
    %23 = arith.mulf %21, %22 : vector<16x4x128xbf16>
    %24 = arith.extf %23 : vector<16x4x128xbf16> to vector<16x4x128xf32>
    %cst_9 = arith.constant dense<0.000000e+00> : vector<16x128xf32>
    %25 = vector.multi_reduction <add>, %24, %cst_9 [1] : vector<16x4x128xf32> to vector<16x128xf32>
    %26 = arith.truncf %25 : vector<16x128xf32> to vector<16x128xbf16>
    %c0_10 = arith.constant 0 : index
    %c0_11 = arith.constant 0 : index
    %27 = vector.load %arg4[%c0_10, %c0_11] : memref<16x128xbf16, #tpu.memory_space<vmem>>, vector<16x128xbf16>
    tpu.vector_store %arg4[%c0_10, %c0_11], %26 {strides = array<i32>} : memref<16x128xbf16, #tpu.memory_space<vmem>>, vector<16x128xbf16>,
    return
  }
  func.func @transform_0(%arg0: i32) -> (i32, i32, i32) {
    %c0_i32 = arith.constant 0 : i32
    %c0_i32_0 = arith.constant 0 : i32
    %c0_i32_1 = arith.constant 0 : i32
    return %arg0, %c0_i32, %c0_i32_0 : i32, i32, i32
  }
  func.func @transform_1(%arg0: i32) -> (i32, i32) {
    %c0_i32 = arith.constant 0 : i32
    %c0_i32_0 = arith.constant 0 : i32
    return %arg0, %c0_i32 : i32, i32
  }
  func.func @transform_2(%arg0: i32) -> (i32, i32) {
    %c0_i32 = arith.constant 0 : i32
    %c0_i32_0 = arith.constant 0 : i32
    return %arg0, %c0_i32 : i32, i32
  }
  func.func @transform_3(%arg0: i32) -> (i32, i32) {
    %c0_i32 = arith.constant 0 : i32
    %c0_i32_0 = arith.constant 0 : i32
    return %arg0, %c0_i32 : i32, i32
  }
}

</mosaic_0001>

<llo_original>
// kernel: tpu_custom_call.1
$region0: #{tpu_custom_call.1}
  #allocation0 [shape = 'u32[]', space=smem, size = 0x4, offset = 0x4, fixed_abs, tag = 'smem constant byte address 0x4 - core index']
  #allocation1 [shape = 'u32[144,128]{1,0:T(1,128)}', space=vmem, size = 0x12000, scoped, tag = 'internal scratch']
  %s0 = inlined_call_operand.hbm [shape: bf16[16,4,128], index: 0, kind: input, shape index: {}]
  %s1 = inlined_call_operand.hbm [shape: f32[16,4], index: 1, kind: input, shape index: {}]
  %s2 = inlined_call_operand.hbm [shape: f32[16,4], index: 2, kind: input, shape index: {}]
  %s3 = inlined_call_operand.hbm [shape: bf16[16,128], index: 3, kind: output, shape index: {}]
  %s4 = sld [smem:[#allocation0]]
  $region34: #{tpu_custom_call.1} parent=0
    _
  %s6 = ssub.s32 1, %s4
  %s7 = scalar_select 0, %s6, %s4
  $region1: #{tpu_custom_call.1} parent=0
    #allocation2 [shape = 'u8[16384]{0}', space=vmem, size = 0x4000, scoped, tag = 'input window, operand 0, single buffered']
    #allocation3 [shape = 's32[1]{0}', space=sflag, size = 0x4, scoped, tag = 'scoped memory for tpu_custom_call.1']
    #allocation4 [shape = 's32[1]{0}', space=sflag, size = 0x4, scoped, tag = 'scoped memory for tpu_custom_call.1']
    #allocation5 [shape = 'u8[8192]{0}', space=vmem, size = 0x2000, scoped, tag = 'input window, operand 1, single buffered']
    #allocation6 [shape = 's32[1]{0}', space=sflag, size = 0x4, scoped, tag = 'scoped memory for tpu_custom_call.1']
    #allocation7 [shape = 'u8[8192]{0}', space=vmem, size = 0x2000, scoped, tag = 'input window, operand 2, single buffered']
    #allocation8 [shape = 'u8[4096]{0}', space=vmem, size = 0x1000, scoped, tag = 'output window, operand 0, single buffered']
    %8 = vsyncpa [#allocation3], 0
    %9 = vsyncpa [#allocation6], 0
    %10 = vsyncpa [#allocation4], 0
    // Predicated region
    $region2: #{tpu_custom_call.1} parent=1 // pred_check
      _
    $region3: #{tpu_custom_call.1} parent=1 // pred_check_branch
      %12 = sbr.rel (0) target = $region5
    $region4: #{tpu_custom_call.1} parent=1 // pred_region
      %s14 = ssub.s32 512, 512
      %15 = vsyncadd [#allocation3], %s14
      %s16 = sshll.u32 [#allocation2], 4
      %s17 = int_to_ptr.vmem [resolvable:$true] %s16
      %22 = dma.hbm_to_vmem [thread:$0]  %s0, 512, %s17, [#allocation3], 32, 32, 2
    $region5: #{tpu_custom_call.1} parent=1 // pred_fallthru
      _
    // Predicated region
    $region6: #{tpu_custom_call.1} parent=1 // pred_check
      _
    $region7: #{tpu_custom_call.1} parent=1 // pred_check_branch
      %24 = sbr.rel (0) target = $region9
    $region8: #{tpu_custom_call.1} parent=1 // pred_region
      %s26 = ssub.s32 256, 256
      %27 = vsyncadd [#allocation6], %s26
      %s28 = sshll.u32 [#allocation5], 4
      %s29 = int_to_ptr.vmem [resolvable:$true] %s28
      %34 = dma.hbm_to_vmem [thread:$0]  %s1, 256, %s29, [#allocation6], 128, 128, 8
    $region9: #{tpu_custom_call.1} parent=1 // pred_fallthru
      _
    // Predicated region
    $region10: #{tpu_custom_call.1} parent=1 // pred_check
      _
    $region11: #{tpu_custom_call.1} parent=1 // pred_check_branch
      %36 = sbr.rel (0) target = $region13
    $region12: #{tpu_custom_call.1} parent=1 // pred_region
      %s38 = ssub.s32 256, 256
      %39 = vsyncadd [#allocation6], %s38
      %s40 = sshll.u32 [#allocation7], 4
      %s41 = int_to_ptr.vmem [resolvable:$true] %s40
      %46 = dma.hbm_to_vmem [thread:$0]  %s2, 256, %s41, [#allocation6], 128, 128, 8
    $region13: #{tpu_custom_call.1} parent=1 // pred_fallthru
      _
    // Predicated region
    $region14: #{tpu_custom_call.1} parent=1 // pred_check
      _
    $region15: #{tpu_custom_call.1} parent=1 // pred_check_branch
      %48 = sbr.rel (0) target = $region17
    $region16: #{tpu_custom_call.1} parent=1 // pred_region
      %49 = dma.done [#allocation3], 512
    $region17: #{tpu_custom_call.1} parent=1 // pred_fallthru
      _
    // Predicated region
    $region18: #{tpu_custom_call.1} parent=1 // pred_check
      _
    $region19: #{tpu_custom_call.1} parent=1 // pred_check_branch
      %51 = sbr.rel (0) target = $region21
    $region20: #{tpu_custom_call.1} parent=1 // pred_region
      %52 = dma.done [#allocation6], 256
    $region21: #{tpu_custom_call.1} parent=1 // pred_fallthru
      _
    // Predicated region
    $region22: #{tpu_custom_call.1} parent=1 // pred_check
      _
    $region23: #{tpu_custom_call.1} parent=1 // pred_check_branch
      %54 = sbr.rel (0) target = $region25
    $region24: #{tpu_custom_call.1} parent=1 // pred_region
      %55 = dma.done [#allocation6], 256
    $region25: #{tpu_custom_call.1} parent=1 // pred_fallthru
      _
    %v56 = vld [vmem:[#allocation5] sm:$0xff]
    %v57 = vld [vmem:[#allocation5 + $0x8] sm:$0xff]
    %v58 = vld [vmem:[#allocation7] sm:$0xff]
    %v59 = vld [vmem:[#allocation7 + $0x8] sm:$0xff]
    %v60 = vmul.f32 %v56, %v58
    %v61 = vmul.f32 %v57, %v59
    %v62 = vsub.f32 1.0, %v56
    %v63 = vsub.f32 1.0, %v57
    %v64 = vmul.f32 %v62, -999.0
    %v65 = vmul.f32 %v63, -999.0
    %v66 = vadd.f32 %v60, %v64
    %v67 = vadd.f32 %v61, %v65
    %vm68 = vcmask 31744
    %v69 = vsel %vm68, %v66, -inf
    %70 = vmax.xlane.f32.xlu0 %v69
    %v71 = vpop.xlane.xlu0 %70
    %v72 = vsel %vm68, %v67, -inf
    %73 = vmax.xlane.f32.xlu0 %v72
    %v74 = vpop.xlane.xlu0 %73
    %v75 = vsub.f32 %v66, %v71
    %v76 = vsub.f32 %v67, %v74
    %v77 = vmul.f32 %v75, 1.442695
    %v78 = vpow.pop %v77
    %v79 = vmul.f32 %v76, 1.442695
    %v80 = vpow.pop %v79
    %v81 = vsel %vm68, %v78, 0.0
    %82 = vadd.xlane.f32.xlu0 %v81
    %v83 = vpop.xlane.xlu0 %82
    %v84 = vsel %vm68, %v80, 0.0
    %85 = vadd.xlane.f32.xlu0 %v84
    %v86 = vpop.xlane.xlu0 %85
    %v87 = vrcp.pop %v83
    %v88 = vrcp.pop %v86
    %v89 = vmul.f32 %v78, %v87
    %v90 = vmul.f32 %v80, %v88
    %v91 = vmul.f32 %v89, %v56
    %v92 = vmul.f32 %v90, %v57
    %v93 = vpack.c.bf16 %v92, %v91
    %v95 = vpack.i.b16 %v93, %v93
    %v97 = vlaneseq
    %v98 = vshrl.u32 %v97, 7
    %v99 = vsub.s32 0, %v98
    %v100 = vrot.slane %v95, %v99
    %102 = vbcast.lane.c.b16.xlu0 %v100, 256
    %v103 = vpop.permute.xlu0 %102
    %v104 = vshrl.u32 %v93, 16
    %v105 = vpack.i.b16 %v104, %v104
    %v107 = vlaneseq
    %v108 = vshrl.u32 %v107, 7
    %v109 = vsub.s32 0, %v108
    %v110 = vrot.slane %v105, %v109
    %112 = vbcast.lane.c.b16.xlu0 %v110, 256
    %v113 = vpop.permute.xlu0 %112
    %v114 = vlaneseq
    %v115 = vshrl.u32 %v114, 7
    %v116 = vsub.s32 1, %v115
    %v117 = vrot.slane %v95, %v116
    %119 = vbcast.lane.c.b16.xlu0 %v117, 256
    %v120 = vpop.permute.xlu0 %119
    %v121 = vlaneseq
    %v122 = vshrl.u32 %v121, 7
    %v123 = vsub.s32 1, %v122
    %v124 = vrot.slane %v105, %v123
    %126 = vbcast.lane.c.b16.xlu0 %v124, 256
    %v127 = vpop.permute.xlu0 %126
    %v128 = vlaneseq
    %v129 = vshrl.u32 %v128, 7
    %v130 = vsub.s32 2, %v129
    %v131 = vrot.slane %v95, %v130
    %133 = vbcast.lane.c.b16.xlu0 %v131, 256
    %v134 = vpop.permute.xlu0 %133
    %v135 = vlaneseq
    %v136 = vshrl.u32 %v135, 7
    %v137 = vsub.s32 2, %v136
    %v138 = vrot.slane %v105, %v137
    %140 = vbcast.lane.c.b16.xlu0 %v138, 256
    %v141 = vpop.permute.xlu0 %140
    %v142 = vlaneseq
    %v143 = vshrl.u32 %v142, 7
    %v144 = vsub.s32 3, %v143
    %v145 = vrot.slane %v95, %v144
    %147 = vbcast.lane.c.b16.xlu0 %v145, 256
    %v148 = vpop.permute.xlu0 %147
    %v149 = vlaneseq
    %v150 = vshrl.u32 %v149, 7
    %v151 = vsub.s32 3, %v150
    %v152 = vrot.slane %v105, %v151
    %154 = vbcast.lane.c.b16.xlu0 %v152, 256
    %v155 = vpop.permute.xlu0 %154
    %v156 = vlaneseq
    %v157 = vshrl.u32 %v156, 7
    %v158 = vsub.s32 4, %v157
    %v159 = vrot.slane %v95, %v158
    %161 = vbcast.lane.c.b16.xlu0 %v159, 256
    %v162 = vpop.permute.xlu0 %161
    %v163 = vlaneseq
    %v164 = vshrl.u32 %v163, 7
    %v165 = vsub.s32 4, %v164
    %v166 = vrot.slane %v105, %v165
    %168 = vbcast.lane.c.b16.xlu0 %v166, 256
    %v169 = vpop.permute.xlu0 %168
    %v170 = vlaneseq
    %v171 = vshrl.u32 %v170, 7
    %v172 = vsub.s32 5, %v171
    %v173 = vrot.slane %v95, %v172
    %175 = vbcast.lane.c.b16.xlu0 %v173, 256
    %v176 = vpop.permute.xlu0 %175
    %v177 = vlaneseq
    %v178 = vshrl.u32 %v177, 7
    %v179 = vsub.s32 5, %v178
    %v180 = vrot.slane %v105, %v179
    %182 = vbcast.lane.c.b16.xlu0 %v180, 256
    %v183 = vpop.permute.xlu0 %182
    %v184 = vlaneseq
    %v185 = vshrl.u32 %v184, 7
    %v186 = vsub.s32 6, %v185
    %v187 = vrot.slane %v95, %v186
    %189 = vbcast.lane.c.b16.xlu0 %v187, 256
    %v190 = vpop.permute.xlu0 %189
    %v191 = vlaneseq
    %v192 = vshrl.u32 %v191, 7
    %v193 = vsub.s32 6, %v192
    %v194 = vrot.slane %v105, %v193
    %196 = vbcast.lane.c.b16.xlu0 %v194, 256
    %v197 = vpop.permute.xlu0 %196
    %v198 = vlaneseq
    %v199 = vshrl.u32 %v198, 7
    %v200 = vsub.s32 7, %v199
    %v201 = vrot.slane %v95, %v200
    %203 = vbcast.lane.c.b16.xlu0 %v201, 256
    %v204 = vpop.permute.xlu0 %203
    %v205 = vlaneseq
    %v206 = vshrl.u32 %v205, 7
    %v207 = vsub.s32 7, %v206
    %v208 = vrot.slane %v105, %v207
    %210 = vbcast.lane.c.b16.xlu0 %v208, 256
    %v211 = vpop.permute.xlu0 %210
    %v212 = vld [vmem:[#allocation2] sm:$0x3]
    %v213 = vld [vmem:[#allocation2 + $0x2] sm:$0x3]
    %v214 = vld [vmem:[#allocation2 + $0x4] sm:$0x3]
    %v215 = vld [vmem:[#allocation2 + $0x6] sm:$0x3]
    %v216 = vld [vmem:[#allocation2 + $0x8] sm:$0x3]
    %v217 = vld [vmem:[#allocation2 + $0xa] sm:$0x3]
    %v218 = vld [vmem:[#allocation2 + $0xc] sm:$0x3]
    %v219 = vld [vmem:[#allocation2 + $0xe] sm:$0x3]
    %v220 = vld [vmem:[#allocation2 + $0x10] sm:$0x3]
    %v221 = vld [vmem:[#allocation2 + $0x12] sm:$0x3]
    %v222 = vld [vmem:[#allocation2 + $0x14] sm:$0x3]
    %v223 = vld [vmem:[#allocation2 + $0x16] sm:$0x3]
    %v224 = vld [vmem:[#allocation2 + $0x18] sm:$0x3]
    %v225 = vld [vmem:[#allocation2 + $0x1a] sm:$0x3]
    %v226 = vld [vmem:[#allocation2 + $0x1c] sm:$0x3]
    %v227 = vld [vmem:[#allocation2 + $0x1e] sm:$0x3]
    %v228 = vmul.bf16 %v212, %v103
    %v229 = vmul.bf16 %v213, %v113
    %v230 = vmul.bf16 %v214, %v120
    %v231 = vmul.bf16 %v215, %v127
    %v232 = vmul.bf16 %v216, %v134
    %v233 = vmul.bf16 %v217, %v141
    %v234 = vmul.bf16 %v218, %v148
    %v235 = vmul.bf16 %v219, %v155
    %v236 = vmul.bf16 %v220, %v162
    %v237 = vmul.bf16 %v221, %v169
    %v238 = vmul.bf16 %v222, %v176
    %v239 = vmul.bf16 %v223, %v183
    %v240 = vmul.bf16 %v224, %v190
    %v241 = vmul.bf16 %v225, %v197
    %v242 = vmul.bf16 %v226, %v204
    %v243 = vmul.bf16 %v227, %v211
    %v244 = vunpack.c.l.bf16 %v228
    %v245 = vunpack.c.l.bf16 %v229
    %v246 = vunpack.c.l.bf16 %v230
    %v247 = vunpack.c.l.bf16 %v231
    %v248 = vunpack.c.l.bf16 %v232
    %v249 = vunpack.c.l.bf16 %v233
    %v250 = vunpack.c.l.bf16 %v234
    %v251 = vunpack.c.l.bf16 %v235
    %v252 = vunpack.c.l.bf16 %v236
    %v253 = vunpack.c.l.bf16 %v237
    %v254 = vunpack.c.l.bf16 %v238
    %v255 = vunpack.c.l.bf16 %v239
    %v256 = vunpack.c.l.bf16 %v240
    %v257 = vunpack.c.l.bf16 %v241
    %v258 = vunpack.c.l.bf16 %v242
    %v259 = vunpack.c.l.bf16 %v243
    %vm260 = vcmask 1043456
    %v261 = vsel %vm260, %v244, 0.0
    %v262 = vrot.slane %v261, 4
    %v263 = vadd.f32 %v261, %v262
    %v264 = vrot.slane %v263, 2
    %v265 = vadd.f32 %v263, %v264
    %v266 = vrot.slane %v265, 1
    %v267 = vadd.f32 %v265, %v266
    %v268 = vsel %vm260, %v245, 0.0
    %v269 = vrot.slane %v268, 4
    %v270 = vadd.f32 %v268, %v269
    %v271 = vrot.slane %v270, 2
    %v272 = vadd.f32 %v270, %v271
    %v273 = vrot.slane %v272, 1
    %v274 = vadd.f32 %v272, %v273
    %v275 = vsel %vm260, %v246, 0.0
    %v276 = vrot.slane %v275, 4
    %v277 = vadd.f32 %v275, %v276
    %v278 = vrot.slane %v277, 2
    %v279 = vadd.f32 %v277, %v278
    %v280 = vrot.slane %v279, 1
    %v281 = vadd.f32 %v279, %v280
    %v282 = vsel %vm260, %v247, 0.0
    %v283 = vrot.slane %v282, 4
    %v284 = vadd.f32 %v282, %v283
    %v285 = vrot.slane %v284, 2
    %v286 = vadd.f32 %v284, %v285
    %v287 = vrot.slane %v286, 1
    %v288 = vadd.f32 %v286, %v287
    %v289 = vsel %vm260, %v248, 0.0
    %v290 = vrot.slane %v289, 4
    %v291 = vadd.f32 %v289, %v290
    %v292 = vrot.slane %v291, 2
    %v293 = vadd.f32 %v291, %v292
    %v294 = vrot.slane %v293, 1
    %v295 = vadd.f32 %v293, %v294
    %v296 = vsel %vm260, %v249, 0.0
    %v297 = vrot.slane %v296, 4
    %v298 = vadd.f32 %v296, %v297
    %v299 = vrot.slane %v298, 2
    %v300 = vadd.f32 %v298, %v299
    %v301 = vrot.slane %v300, 1
    %v302 = vadd.f32 %v300, %v301
    %v303 = vsel %vm260, %v250, 0.0
    %v304 = vrot.slane %v303, 4
    %v305 = vadd.f32 %v303, %v304
    %v306 = vrot.slane %v305, 2
    %v307 = vadd.f32 %v305, %v306
    %v308 = vrot.slane %v307, 1
    %v309 = vadd.f32 %v307, %v308
    %v310 = vsel %vm260, %v251, 0.0
    %v311 = vrot.slane %v310, 4
    %v312 = vadd.f32 %v310, %v311
    %v313 = vrot.slane %v312, 2
    %v314 = vadd.f32 %v312, %v313
    %v315 = vrot.slane %v314, 1
    %v316 = vadd.f32 %v314, %v315
    %v317 = vsel %vm260, %v252, 0.0
    %v318 = vrot.slane %v317, 4
    %v319 = vadd.f32 %v317, %v318
    %v320 = vrot.slane %v319, 2
    %v321 = vadd.f32 %v319, %v320
    %v322 = vrot.slane %v321, 1
    %v323 = vadd.f32 %v321, %v322
    %v324 = vsel %vm260, %v253, 0.0
    %v325 = vrot.slane %v324, 4
    %v326 = vadd.f32 %v324, %v325
    %v327 = vrot.slane %v326, 2
    %v328 = vadd.f32 %v326, %v327
    %v329 = vrot.slane %v328, 1
    %v330 = vadd.f32 %v328, %v329
    %v331 = vsel %vm260, %v254, 0.0
    %v332 = vrot.slane %v331, 4
    %v333 = vadd.f32 %v331, %v332
    %v334 = vrot.slane %v333, 2
    %v335 = vadd.f32 %v333, %v334
    %v336 = vrot.slane %v335, 1
    %v337 = vadd.f32 %v335, %v336
    %v338 = vsel %vm260, %v255, 0.0
    %v339 = vrot.slane %v338, 4
    %v340 = vadd.f32 %v338, %v339
    %v341 = vrot.slane %v340, 2
    %v342 = vadd.f32 %v340, %v341
    %v343 = vrot.slane %v342, 1
    %v344 = vadd.f32 %v342, %v343
    %v345 = vsel %vm260, %v256, 0.0
    %v346 = vrot.slane %v345, 4
    %v347 = vadd.f32 %v345, %v346
    %v348 = vrot.slane %v347, 2
    %v349 = vadd.f32 %v347, %v348
    %v350 = vrot.slane %v349, 1
    %v351 = vadd.f32 %v349, %v350
    %v352 = vsel %vm260, %v257, 0.0
    %v353 = vrot.slane %v352, 4
    %v354 = vadd.f32 %v352, %v353
    %v355 = vrot.slane %v354, 2
    %v356 = vadd.f32 %v354, %v355
    %v357 = vrot.slane %v356, 1
    %v358 = vadd.f32 %v356, %v357
    %v359 = vsel %vm260, %v258, 0.0
    %v360 = vrot.slane %v359, 4
    %v361 = vadd.f32 %v359, %v360
    %v362 = vrot.slane %v361, 2
    %v363 = vadd.f32 %v361, %v362
    %v364 = vrot.slane %v363, 1
    %v365 = vadd.f32 %v363, %v364
    %v366 = vsel %vm260, %v259, 0.0
    %v367 = vrot.slane %v366, 4
    %v368 = vadd.f32 %v366, %v367
    %v369 = vrot.slane %v368, 2
    %v370 = vadd.f32 %v368, %v369
    %v371 = vrot.slane %v370, 1
    %v372 = vadd.f32 %v370, %v371
    %v373 = vpack.c.bf16 %v267, %v267
    %v374 = vpack.c.bf16 %v274, %v274
    %v375 = vpack.c.bf16 %v281, %v281
    %v376 = vpack.c.bf16 %v288, %v288
    %v377 = vpack.c.bf16 %v295, %v295
    %v378 = vpack.c.bf16 %v302, %v302
    %v379 = vpack.c.bf16 %v309, %v309
    %v380 = vpack.c.bf16 %v316, %v316
    %v381 = vpack.c.bf16 %v323, %v323
    %v382 = vpack.c.bf16 %v330, %v330
    %v383 = vpack.c.bf16 %v337, %v337
    %v384 = vpack.c.bf16 %v344, %v344
    %v385 = vpack.c.bf16 %v351, %v351
    %v386 = vpack.c.bf16 %v358, %v358
    %v387 = vpack.c.bf16 %v365, %v365
    %v388 = vpack.c.bf16 %v372, %v372
    %v405 = vunpack.c.l.b16 %v373
    %v406 = vunpack.c.l.b16 %v374
    %v407 = vunpack.c.l.b16 %v375
    %v408 = vunpack.c.l.b16 %v376
    %v409 = vunpack.c.l.b16 %v377
    %v410 = vunpack.c.l.b16 %v378
    %v411 = vunpack.c.l.b16 %v379
    %v412 = vunpack.c.l.b16 %v380
    %v413 = vunpack.c.l.b16 %v381
    %v414 = vunpack.c.l.b16 %v382
    %v415 = vunpack.c.l.b16 %v383
    %v416 = vunpack.c.l.b16 %v384
    %v417 = vunpack.c.l.b16 %v385
    %v418 = vunpack.c.l.b16 %v386
    %v419 = vunpack.c.l.b16 %v387
    %v420 = vunpack.c.l.b16 %v388
    %v421 = vpack.c.b16 %v405, %v405
    %v422 = vpack.c.b16 %v406, %v406
    %v423 = vpack.c.b16 %v407, %v407
    %v424 = vpack.c.b16 %v408, %v408
    %v425 = vpack.c.b16 %v409, %v409
    %v426 = vpack.c.b16 %v410, %v410
    %v427 = vpack.c.b16 %v411, %v411
    %v428 = vpack.c.b16 %v412, %v412
    %v429 = vpack.c.b16 %v413, %v413
    %v430 = vpack.c.b16 %v414, %v414
    %v431 = vpack.c.b16 %v415, %v415
    %v432 = vpack.c.b16 %v416, %v416
    %v433 = vpack.c.b16 %v417, %v417
    %v434 = vpack.c.b16 %v418, %v418
    %v435 = vpack.c.b16 %v419, %v419
    %v436 = vpack.c.b16 %v420, %v420
    %v437 = vunpack.c.l.b16 %v421
    %v438 = vunpack.c.l.b16 %v422
    %v439 = vunpack.c.l.b16 %v423
    %v440 = vunpack.c.l.b16 %v424
    %v441 = vunpack.c.l.b16 %v425
    %v442 = vunpack.c.l.b16 %v426
    %v443 = vunpack.c.l.b16 %v427
    %v444 = vunpack.c.l.b16 %v428
    %v445 = vunpack.c.l.b16 %v429
    %v446 = vunpack.c.l.b16 %v430
    %v447 = vunpack.c.l.b16 %v431
    %v448 = vunpack.c.l.b16 %v432
    %v449 = vunpack.c.l.b16 %v433
    %v450 = vunpack.c.l.b16 %v434
    %v451 = vunpack.c.l.b16 %v435
    %v452 = vunpack.c.l.b16 %v436
    %vm453 = vcmask 1041409
    %v454 = vsel %vm453, %v438, %v437
    %vm455 = vcmask 1042434
    %v456 = vsel %vm455, %v439, %v454
    %vm457 = vcmask 1043459
    %v458 = vsel %vm457, %v440, %v456
    %vm459 = vcmask 1044484
    %v460 = vsel %vm459, %v441, %v458
    %vm461 = vcmask 1045509
    %v462 = vsel %vm461, %v442, %v460
    %vm463 = vcmask 1046534
    %v464 = vsel %vm463, %v443, %v462
    %vm465 = vcmask 1047559
    %v466 = vsel %vm465, %v444, %v464
    %v467 = vsel %vm453, %v446, %v445
    %v468 = vsel %vm455, %v447, %v467
    %v469 = vsel %vm457, %v448, %v468
    %v470 = vsel %vm459, %v449, %v469
    %v471 = vsel %vm461, %v450, %v470
    %v472 = vsel %vm463, %v451, %v471
    %v473 = vsel %vm465, %v452, %v472
    %v474 = vpack.c.b16 %v466, %v466
    %v475 = vpack.c.b16 %v473, %v473
    %478 = vst [vmem:[#allocation8] sm:$0xf] %v474
    %479 = vst [vmem:[#allocation8 + $0x4] sm:$0xf] %v475
    // Predicated region
    $region26: #{tpu_custom_call.1} parent=1 // pred_check
      _
    $region27: #{tpu_custom_call.1} parent=1 // pred_check_branch
      %481 = sbr.rel (0) target = $region29
    $region28: #{tpu_custom_call.1} parent=1 // pred_region
      %s483 = ssub.s32 128, 128
      %484 = vsyncadd [#allocation4], %s483
      %s485 = sshll.u32 [#allocation8], 4
      %s486 = int_to_ptr.vmem [resolvable:$true] %s485
      %491 = dma.vmem_to_hbm [thread:$0]  %s486, 128, %s3, [#allocation4], 64, 64, 4
    $region29: #{tpu_custom_call.1} parent=1 // pred_fallthru
      _
    // Predicated region
    $region30: #{tpu_custom_call.1} parent=1 // pred_check
      _
    $region31: #{tpu_custom_call.1} parent=1 // pred_check_branch
      %493 = sbr.rel (0) target = $region33
    $region32: #{tpu_custom_call.1} parent=1 // pred_region
      %494 = dma.done [#allocation4], 128
    $region33: #{tpu_custom_call.1} parent=1 // pred_fallthru
      _
    %495 = vsyncpa [#allocation3], 1
    %496 = vsyncpa [#allocation6], 1
    %497 = vsyncpa [#allocation4], 1

</llo_original>
